<compile_context>
chip_gen: v7x
topology: tpu7x:2x2x1
jax: 0.10.0
libtpu: 0.0.40
codegen_flags: <defaults>
</compile_context>

<pallas_src>
import functools

import jax
import jax.numpy as jnp
from jax.experimental import pallas as pl
from jax.experimental.pallas import tpu as pltpu

EPS = 1e-9


# ---------------------------------------------------------------------------
# Kernels (purely elementwise; shared by every tiling path).
# ---------------------------------------------------------------------------
def _iso_gauss_mean_kernel(mu_upd_ref, var_ref, mu_ref, logvar_ref,
                           new_mu_ref, new_logvar_ref):
    # softplus(var) = logaddexp(0, var)
    logvar_upd = jnp.logaddexp(0.0, var_ref[...])
    new_mu_ref[...] = mu_ref[...] + mu_upd_ref[...]
    # Matches the reference exp(logvar)*exp(logvar_upd)+eps numerically
    # (including its overflow behaviour) but with a single exp per element.
    t = jnp.exp(logvar_ref[...] + logvar_upd) + EPS
    new_logvar_ref[...] = jnp.log(t)


def _iso_gauss_sample_kernel(mu_upd_ref, var_ref, mu_ref, logvar_ref, eps_ref,
                             new_mu_ref, new_logvar_ref, sample_ref):
    logvar_upd = jnp.logaddexp(0.0, var_ref[...])
    new_mu = mu_ref[...] + mu_upd_ref[...]
    t = jnp.exp(logvar_ref[...] + logvar_upd) + EPS
    new_mu_ref[...] = new_mu
    new_logvar_ref[...] = jnp.log(t)
    # sample = new_mu + exp(new_logvar) * eps ; exp(new_logvar) == t exactly.
    sample_ref[...] = new_mu + t * eps_ref[...]


# ---------------------------------------------------------------------------
# Tiling helpers.
# ---------------------------------------------------------------------------
def _round_up(x, m):
    return (x + m - 1) // m * m


def _vmem_capacity_bytes():
    try:
        cap = int(pltpu.get_tpu_info().vmem_capacity_bytes)
        if cap > 0:
            return cap
    except Exception:
        pass
    return 64 << 20  # conservative (v7x-sized) default


def _pick_batch_tile(rows, row_bytes, per_stream_budget, min_tiles=1,
                     max_batch_tile=None):
    """Rows per block: a multiple of 8 (or the full extent), load-balanced
    across grid steps so the partial edge block wastes at most 7 rows."""
    bt_target = max(8, (per_stream_budget // max(row_bytes, 1)) // 8 * 8)
    if max_batch_tile is not None:
        bt_target = min(bt_target, max(8, max_batch_tile // 8 * 8))
    num_tiles = max(min_tiles, pl.cdiv(rows, bt_target))
    bt = _round_up(pl.cdiv(rows, num_tiles), 8)
    return rows if bt >= rows else bt


def _pick_feature_tile(d, per_stream_budget):
    """d is a multiple of 128: largest multiple-of-128 divisor of d whose
    8-row block stays within the per-stream VMEM budget (wide-D guard)."""
    max_elems = max(128, (per_stream_budget // (8 * 4)) // 128 * 128)
    if d <= max_elems:
        return d
    n128 = d // 128
    best = 128
    for g in range(1, n128 + 1):
        if n128 % g == 0 and 128 * g <= max_elems:
            best = 128 * g
    return best


# ---------------------------------------------------------------------------
# Wrapper.
# ---------------------------------------------------------------------------
@functools.partial(jax.jit, static_argnames=("return_mean", "max_batch_tile"))
def isotropic_gaussian_forward(logits, mu, logvar, key=None,
                               return_mean=False, max_batch_tile=None):
    """Returns (forward_output, new_mu, new_logvar)."""
    B, two_d = logits.shape
    assert two_d % 2 == 0
    D = two_d // 2
    assert mu.shape == (B, D) and logvar.shape == (B, D)

    f32 = jnp.float32
    logits = logits.astype(f32)
    mu = mu.astype(f32)
    logvar = logvar.astype(f32)

    cap = _vmem_capacity_bytes()
    small_vmem = cap <= (96 << 20)          # v7x-class: 64 MiB VMEM, 2 TCs
    n_streams = 6 if return_mean else 8     # double-buffered in/out streams
    per_stream_budget = min(4 << 20,
                            max(1 << 20, int(0.55 * cap) // (2 * n_streams)))

    if not return_mean:
        assert key is not None, "a PRNG key is required unless return_mean=True"
        eps = jax.random.normal(key, (B, D), dtype=f32)

    reshape_back = None
    if D % 128 == 0:
        # Lane-aligned: split the mu/var halves DMA-side by passing logits
        # twice with different feature-block index maps.
        tile_d = _pick_feature_tile(D, per_stream_budget)
        nf = D // tile_d
        min_tiles = 2 if (small_vmem and B >= 16) else 1
        bt = _pick_batch_tile(B, tile_d * 4, per_stream_budget,
                              min_tiles=min_tiles, max_batch_tile=max_batch_tile)
        grid = (pl.cdiv(B, bt), nf)
        cols = tile_d
        out_rows, out_cols = B, D

        lo_spec = pl.BlockSpec((bt, tile_d), lambda i, j: (i, j))
        hi_spec = pl.BlockSpec((bt, tile_d), lambda i, j, _nf=nf: (i, j + _nf))
        spec = pl.BlockSpec((bt, tile_d), lambda i, j: (i, j))

        ins = [logits, logits, mu, logvar]
        in_specs = [lo_spec, hi_spec, spec, spec]
        if not return_mean:
            ins.append(eps)
            in_specs.append(spec)
        out_spec = spec
        dim_sem = ("parallel", "parallel")
    else:
        # D not lane-aligned: split once in the wrapper ...
        mu_upd, var_part = jnp.split(logits, 2, axis=1)
        if (B * D) % 128 == 0:
            # ... and run on a lane-dense (rows, 128) view so every load/store
            # is a full unmasked vector op (reshape of contiguous halves).
            rows, cols = (B * D) // 128, 128

            def _rs(a):
                return a.reshape(rows, cols)

            ins = [_rs(mu_upd), _rs(var_part), _rs(mu), _rs(logvar)]
            if not return_mean:
                ins.append(_rs(eps))
            reshape_back = (B, D)
        else:
            # TODO(synk): doubly-unaligned *and* very wide D would need a
            # masked feature-axis grid; this fallback only hits small shapes.
            rows, cols = B, D
            ins = [mu_upd, var_part, mu, logvar]
            if not return_mean:
                ins.append(eps)
        min_tiles = 2 if (small_vmem and rows >= 16) else 1
        bt = _pick_batch_tile(rows, cols * 4, per_stream_budget,
                              min_tiles=min_tiles, max_batch_tile=max_batch_tile)
        grid = (pl.cdiv(rows, bt),)
        out_rows, out_cols = rows, cols
        spec = pl.BlockSpec((bt, cols), lambda i: (i, 0))
        in_specs = [spec] * len(ins)
        out_spec = spec
        dim_sem = ("parallel",)

    block_bytes = bt * cols * 4
    working_set = n_streams * 2 * block_bytes
    vmem_limit = int(min(int(0.75 * cap),
                         max(32 << 20, working_set + (8 << 20))))
    cparams = pltpu.CompilerParams(dimension_semantics=dim_sem,
                                   vmem_limit_bytes=vmem_limit)

    out_shape = [jax.ShapeDtypeStruct((out_rows, out_cols), f32),
                 jax.ShapeDtypeStruct((out_rows, out_cols), f32)]
    out_specs = [out_spec, out_spec]
    kernel = _iso_gauss_mean_kernel
    if not return_mean:
        out_shape.append(jax.ShapeDtypeStruct((out_rows, out_cols), f32))
        out_specs.append(out_spec)
        kernel = _iso_gauss_sample_kernel

    results = pl.pallas_call(
        kernel,
        out_shape=tuple(out_shape),
        grid=grid,
        in_specs=in_specs,
        out_specs=tuple(out_specs),
        # Mirror the in-place PyTorch update: mu -> new_mu, logvar -> new_logvar.
        input_output_aliases={2: 0, 3: 1},
        compiler_params=cparams,
    )(*ins)

    if return_mean:
        new_mu, new_logvar = results
        out = new_mu
    else:
        new_mu, new_logvar, out = results

    if reshape_back is not None:
        new_mu = new_mu.reshape(reshape_back)
        new_logvar = new_logvar.reshape(reshape_back)
        out = out.reshape(reshape_back)
    return out, new_mu, new_logvar


# ---------------------------------------------------------------------------
# Pure-JAX reference (forward semantics of the PyTorch module).
# ---------------------------------------------------------------------------
def _reference_state(logits, mu, logvar):
    D = mu.shape[-1]
    mu_upd = logits[:, :D]
    var_part = logits[:, D:]
    logvar_upd = jax.nn.softplus(var_part)
    new_mu = mu + mu_upd
    new_logvar = jnp.log(jnp.exp(logvar) * jnp.exp(logvar_upd) + EPS)
    return new_mu, new_logvar


if __name__ == "__main__":
    root = jax.random.PRNGKey(0)
    case_keys = jax.random.split(root, 8)

    def make_inputs(k, B, D):
        k1, k2, k3 = jax.random.split(k, 3)
        mu0 = jax.random.normal(k1, (B, D), jnp.float32) * 0.1
        logvar0 = jax.random.normal(k2, (B, D), jnp.float32) * 0.1
        logits = jax.random.normal(k3, (B, 2 * D), jnp.float32)
        return mu0, logvar0, logits

    def check_sample(k_in, k_noise, B, D, max_batch_tile=None):
        mu0, logvar0, logits = make_inputs(k_in, B, D)
        out, new_mu, new_logvar = isotropic_gaussian_forward(
            logits, mu0, logvar0, key=k_noise,
            return_mean=False, max_batch_tile=max_batch_tile)
        out = jax.block_until_ready(out)
        ref_mu, ref_logvar = _reference_state(logits, mu0, logvar0)
        assert jnp.allclose(new_mu, ref_mu, atol=1e-5, rtol=1e-5)
        assert jnp.allclose(new_logvar, ref_logvar, atol=1e-5, rtol=1e-5)
        # Same key/shape as the wrapper draw -> exact sample reproduction.
        eps_ref = jax.random.normal(k_noise, (B, D), dtype=jnp.float32)
        ref_sample = ref_mu + jnp.exp(ref_logvar) * eps_ref
        assert jnp.allclose(out, ref_sample, atol=2e-5, rtol=2e-5)
        assert bool(jnp.all(jnp.isfinite(out)))

    def check_mean(k_in, B, D, max_batch_tile=None):
        mu0, logvar0, logits = make_inputs(k_in, B, D)
        out, new_mu, new_logvar = isotropic_gaussian_forward(
            logits, mu0, logvar0, return_mean=True,
            max_batch_tile=max_batch_tile)
        out = jax.block_until_ready(out)
        ref_mu, ref_logvar = _reference_state(logits, mu0, logvar0)
        assert jnp.allclose(out, ref_mu, atol=1e-5, rtol=1e-5)
        assert jnp.allclose(new_mu, ref_mu, atol=1e-5, rtol=1e-5)
        assert jnp.allclose(new_logvar, ref_logvar, atol=1e-5, rtol=1e-5)

    # 1) sample, lane-aligned D (DMA-side mu/var split), single batch tile.
    check_sample(case_keys[0], case_keys[1], B=16, D=128)
    # 2) return_mean, non-aligned D with B*D % 128 != 0 (full-block fallback).
    check_mean(case_keys[2], B=10, D=32)
    # 3) sample, non-aligned D but B*D % 128 == 0 (lane-dense (R,128) path).
    check_sample(case_keys[3], case_keys[4], B=16, D=96)
    # 4) sample, multi-step grid with a partial edge block (20 = 8 + 8 + 4).
    check_sample(case_keys[5], case_keys[6], B=20, D=128, max_batch_tile=8)

    print("KERNEL_OK")
</pallas_src>

<mosaic_0001>
module attributes {stable_mosaic.version = 11 : i64} {
  func.func @_iso_gauss_sample_kernel(%arg0: i32, %arg1: i32, %arg2: memref<8x128xf32, #tpu.memory_space<vmem>>, %arg3: memref<8x128xf32, #tpu.memory_space<vmem>>, %arg4: memref<8x128xf32, #tpu.memory_space<vmem>>, %arg5: memref<8x128xf32, #tpu.memory_space<vmem>>, %arg6: memref<8x128xf32, #tpu.memory_space<vmem>>, %arg7: memref<8x128xf32, #tpu.memory_space<vmem>>, %arg8: memref<8x128xf32, #tpu.memory_space<vmem>>, %arg9: memref<8x128xf32, #tpu.memory_space<vmem>>) attributes {dimension_semantics = [#tpu.dimension_semantics<parallel>, #tpu.dimension_semantics<parallel>], iteration_bounds = array<i64: 2, 1>, scalar_prefetch = 0 : i64, scratch_operands = 0 : i64, tpu.core_type = #tpu.core_type<tc>, window_params = [{transform_indices = @transform_0, window_bounds = array<i64: 8, 128>}, {transform_indices = @transform_1, window_bounds = array<i64: 8, 128>}, {transform_indices = @transform_2, window_bounds = array<i64: 8, 128>}, {transform_indices = @transform_3, window_bounds = array<i64: 8, 128>}, {transform_indices = @transform_4, window_bounds = array<i64: 8, 128>}, {transform_indices = @transform_5, window_bounds = array<i64: 8, 128>}, {transform_indices = @transform_6, window_bounds = array<i64: 8, 128>}, {transform_indices = @transform_7, window_bounds = array<i64: 8, 128>}]} {
    %c0 = arith.constant 0 : index
    %c0_0 = arith.constant 0 : index
    %0 = vector.load %arg3[%c0, %c0_0] : memref<8x128xf32, #tpu.memory_space<vmem>>, vector<8x128xf32>
    %cst = arith.constant 0.000000e+00 : f32
    %1 = vector.broadcast %cst : f32 to vector<8x128xf32>
    %2 = arith.maximumf %1, %0 : vector<8x128xf32>
    %3 = vector.broadcast %cst : f32 to vector<8x128xf32>
    %4 = arith.subf %3, %0 : vector<8x128xf32>
    %5 = arith.cmpf one, %4, %4 : vector<8x128xf32>
    %6 = vector.broadcast %cst : f32 to vector<8x128xf32>
    %7 = arith.addf %6, %0 : vector<8x128xf32>
    %8 = math.absf %4 : vector<8x128xf32>
    %cst_1 = arith.constant 0.000000e+00 : f32
    %9 = vector.broadcast %cst_1 : f32 to vector<8x128xf32>
    %10 = arith.subf %9, %8 : vector<8x128xf32>
    %11 = math.exp %10 : vector<8x128xf32>
    %12 = math.log1p %11 : vector<8x128xf32>
    %13 = arith.addf %2, %12 : vector<8x128xf32>
    %14 = arith.select %5, %7, %13 : vector<8x128xi1>, vector<8x128xf32>
    %c0_2 = arith.constant 0 : index
    %c0_3 = arith.constant 0 : index
    %15 = vector.load %arg4[%c0_2, %c0_3] : memref<8x128xf32, #tpu.memory_space<vmem>>, vector<8x128xf32>
    %c0_4 = arith.constant 0 : index
    %c0_5 = arith.constant 0 : index
    %16 = vector.load %arg2[%c0_4, %c0_5] : memref<8x128xf32, #tpu.memory_space<vmem>>, vector<8x128xf32>
    %17 = arith.addf %15, %16 : vector<8x128xf32>
    %c0_6 = arith.constant 0 : index
    %c0_7 = arith.constant 0 : index
    %18 = vector.load %arg5[%c0_6, %c0_7] : memref<8x128xf32, #tpu.memory_space<vmem>>, vector<8x128xf32>
    %19 = arith.addf %18, %14 : vector<8x128xf32>
    %20 = math.exp %19 : vector<8x128xf32>
    %cst_8 = arith.constant 9.99999971E-10 : f32
    %21 = vector.broadcast %cst_8 : f32 to vector<8x128xf32>
    %22 = arith.addf %20, %21 : vector<8x128xf32>
    %c0_9 = arith.constant 0 : index
    %c0_10 = arith.constant 0 : index
    %23 = vector.load %arg7[%c0_9, %c0_10] : memref<8x128xf32, #tpu.memory_space<vmem>>, vector<8x128xf32>
    tpu.vector_store %arg7[%c0_9, %c0_10], %17 {strides = array<i32>} : memref<8x128xf32, #tpu.memory_space<vmem>>, vector<8x128xf32>,
    %24 = math.log %22 : vector<8x128xf32>
    %c0_11 = arith.constant 0 : index
    %c0_12 = arith.constant 0 : index
    %25 = vector.load %arg8[%c0_11, %c0_12] : memref<8x128xf32, #tpu.memory_space<vmem>>, vector<8x128xf32>
    tpu.vector_store %arg8[%c0_11, %c0_12], %24 {strides = array<i32>} : memref<8x128xf32, #tpu.memory_space<vmem>>, vector<8x128xf32>,
    %c0_13 = arith.constant 0 : index
    %c0_14 = arith.constant 0 : index
    %26 = vector.load %arg6[%c0_13, %c0_14] : memref<8x128xf32, #tpu.memory_space<vmem>>, vector<8x128xf32>
    %27 = arith.mulf %22, %26 : vector<8x128xf32>
    %28 = arith.addf %17, %27 : vector<8x128xf32>
    %c0_15 = arith.constant 0 : index
    %c0_16 = arith.constant 0 : index
    %29 = vector.load %arg9[%c0_15, %c0_16] : memref<8x128xf32, #tpu.memory_space<vmem>>, vector<8x128xf32>
    tpu.vector_store %arg9[%c0_15, %c0_16], %28 {strides = array<i32>} : memref<8x128xf32, #tpu.memory_space<vmem>>, vector<8x128xf32>,
    return
  }
  func.func @transform_0(%arg0: i32, %arg1: i32) -> (i32, i32) {
    %c0_i32 = arith.constant 0 : i32
    return %arg0, %arg1 : i32, i32
  }
  func.func @transform_1(%arg0: i32, %arg1: i32) -> (i32, i32) {
    %c1_i32 = arith.constant 1 : i32
    %0 = arith.addi %arg1, %c1_i32 : i32
    %c0_i32 = arith.constant 0 : i32
    return %arg0, %0 : i32, i32
  }
  func.func @transform_2(%arg0: i32, %arg1: i32) -> (i32, i32) {
    %c0_i32 = arith.constant 0 : i32
    return %arg0, %arg1 : i32, i32
  }
  func.func @transform_3(%arg0: i32, %arg1: i32) -> (i32, i32) {
    %c0_i32 = arith.constant 0 : i32
    return %arg0, %arg1 : i32, i32
  }
  func.func @transform_4(%arg0: i32, %arg1: i32) -> (i32, i32) {
    %c0_i32 = arith.constant 0 : i32
    return %arg0, %arg1 : i32, i32
  }
  func.func @transform_5(%arg0: i32, %arg1: i32) -> (i32, i32) {
    %c0_i32 = arith.constant 0 : i32
    return %arg0, %arg1 : i32, i32
  }
  func.func @transform_6(%arg0: i32, %arg1: i32) -> (i32, i32) {
    %c0_i32 = arith.constant 0 : i32
    return %arg0, %arg1 : i32, i32
  }
  func.func @transform_7(%arg0: i32, %arg1: i32) -> (i32, i32) {
    %c0_i32 = arith.constant 0 : i32
    return %arg0, %arg1 : i32, i32
  }
}

</mosaic_0001>

<llo_original>
// kernel: isotropic_gaussian_forward.1
$region0: #{isotropic_gaussian_forward.1}
  #allocation0 [shape = 'u32[]', space=smem, size = 0x4, offset = 0x4, fixed_abs, tag = 'smem constant byte address 0x4 - core index']
  #allocation1 [shape = 'u32[144,128]{1,0:T(1,128)}', space=vmem, size = 0x12000, scoped, tag = 'internal scratch']
  %s0 = inlined_call_operand.vmem [shape: f32[16,256], index: 0, kind: input, shape index: {}, may-alias: {0,1}]
  %s1 = inlined_call_operand.vmem [shape: f32[16,256], index: 1, kind: input, shape index: {}, may-alias: {0,1}]
  %s2 = inlined_call_operand.vmem [shape: f32[16,128], index: 2, kind: input, shape index: {}, may-alias: {2,5}]
  %s3 = inlined_call_operand.vmem [shape: f32[16,128], index: 3, kind: input, shape index: {}, may-alias: {3,6}]
  %s4 = inlined_call_operand.vmem [shape: f32[16,128], index: 4, kind: input, shape index: {}]
  %s5 = inlined_call_operand.vmem [shape: f32[16,128], index: 5, kind: output, shape index: {0}, may-alias: {2,5}]
  %s6 = inlined_call_operand.vmem [shape: f32[16,128], index: 6, kind: output, shape index: {1}, may-alias: {3,6}]
  %s7 = inlined_call_operand.hbm [shape: f32[16,128], index: 7, kind: output, shape index: {2}]
  %8 = xla_tuple %s5, %s6, %s7
  %s9 = sld [smem:[#allocation0]]
  $region69: #{isotropic_gaussian_forward.1} parent=0
    _
  %s11 = ssub.s32 1, %s9
  %s12 = scalar_select 0, %s11, %s9
  $region1: #{isotropic_gaussian_forward.1} parent=0
    #allocation2 [shape = 'u8[8192]{0}', space=vmem, size = 0x2000, scoped, tag = 'output window, operand 2']
    #allocation3 [shape = 's32[2]{0}', space=sflag, size = 0x8, scoped, tag = 'scoped memory for isotropic_gaussian_forward.1']
    %13 = vsyncpa [#allocation3], 0
    %s14 = scalar_lea.sflag [#allocation3], 1
    %15 = vsyncpa %s14, 0
    loop: start=0, step=1, limit=4
    $region2: #{isotropic_gaussian_forward.1} parent=1 // loop_pre_header
      _
    $region3: #{isotropic_gaussian_forward.1} parent=1 // loop_header
      %s17 = sphi 0, %s21
      %p18 = scmp.ge.s32.totalorder %s17, 4
      %s24 = sphi 0, %s36
      %s25 = sphi 0, %s32
      %s26 = sphi 0, %s24
      %s27 = sphi 0, %s25
      %s28 = sphi 0, %s26
      %s29 = sphi 0, %s27
      %s41 = sphi 0, %s43
      %s44 = sphi 0, %s41
      %s45 = sphi 0, %s44
      %s61 = sphi 0, %s45
      %s71 = sphi 0, %s73
      %s74 = sphi 0, %s71
      %s75 = sphi 0, %s74
      %s91 = sphi 0, %s75
      %s99 = sphi 0, %s101
      %s102 = sphi 0, %s99
      %s103 = sphi 0, %s102
      %s119 = sphi 0, %s103
      %s127 = sphi 0, %s129
      %s130 = sphi 0, %s127
      %s131 = sphi 0, %s130
      %s147 = sphi 0, %s131
      %s155 = sphi 0, %s157
      %s158 = sphi 0, %s155
      %s159 = sphi 0, %s158
      %s175 = sphi 0, %s159
      %s183 = sphi 0, %s185
      %s186 = sphi 0, %s183
      %s187 = sphi 0, %s186
      %s203 = sphi 0, %s187
      %s211 = sphi 0, %s213
      %s214 = sphi 0, %s211
      %s215 = sphi 0, %s214
      %s231 = sphi 0, %s215
      %s239 = sphi 0, %s241
      %s242 = sphi 0, %s239
      %s243 = sphi 0, %s242
      %s259 = sphi 0, %s243
    $region4: #{isotropic_gaussian_forward.1} parent=1 // loop_header_branch
      %20 = sbr.rel (%p18) target = $region8
    $region5: #{isotropic_gaussian_forward.1} parent=1 // loop_body
      %s22 = ssub.s32 %s17, 1
      %s23 = ssub.s32 %s17, 2
      %s30 = sadd.s32 1, %s25
      %p31 = scmp.ge.s32.totalorder %s30, 1
      %s32 = scalar_select %p31, 0, %s30
      %s33 = sadd.s32 1, %s24
      %s34 = scalar_select %p31, %s33, %s24
      %p35 = scmp.ge.s32.totalorder %s34, 2
      %s36 = scalar_select %p35, 0, %s34
      %s37 = ssub.s32 %s24, %s36
      %s38 = ssub.s32 %s25, %s32
      %s39 = sor.u32 %s37, %s38
      %p40 = scmp.eq.s32.totalorder %s39, 0
      %s42 = sadd.s32 %s41, 1
      %s43 = scalar_select %p40, %s41, %s42
      %p46 = pneg %p40
      %p47 = scmp.eq.s32.totalorder %s17, 1
      %p48 = por %p46, %p47
      %p49 = scmp.ne.s32.totalorder %s41, %s44
      %p50 = scmp.eq.s32.totalorder %s17, 0
      %p51 = por %p49, %p50
      %p52 = scmp.ne.s32.totalorder %s41, %s44
      %p53 = scmp.eq.s32.totalorder %s22, 1
      %p54 = por %p52, %p53
      %p55 = scmp.ne.s32.totalorder %s44, %s45
      %p56 = scmp.eq.s32.totalorder %s22, 0
      %p57 = por %p55, %p56
      %p58 = scmp.ne.s32.totalorder %s44, %s45
      %p59 = scmp.eq.s32.totalorder %s23, 1
      %p60 = por %p58, %p59
      %p62 = scmp.ne.s32.totalorder %s45, %s61
      %p63 = scmp.eq.s32.totalorder %s23, 0
      %p64 = por %p62, %p63
      %s65 = sadd.s32 %s25, 1
      %s66 = sadd.s32 %s32, 1
      %s67 = ssub.s32 %s24, %s36
      %s68 = ssub.s32 %s65, %s66
      %s69 = sor.u32 %s67, %s68
      %p70 = scmp.eq.s32.totalorder %s69, 0
      %s72 = sadd.s32 %s71, 1
      %s73 = scalar_select %p70, %s71, %s72
      %p76 = pneg %p70
      %p77 = scmp.eq.s32.totalorder %s17, 1
      %p78 = por %p76, %p77
      %p79 = scmp.ne.s32.totalorder %s71, %s74
      %p80 = scmp.eq.s32.totalorder %s17, 0
      %p81 = por %p79, %p80
      %p82 = scmp.ne.s32.totalorder %s71, %s74
      %p83 = scmp.eq.s32.totalorder %s22, 1
      %p84 = por %p82, %p83
      %p85 = scmp.ne.s32.totalorder %s74, %s75
      %p86 = scmp.eq.s32.totalorder %s22, 0
      %p87 = por %p85, %p86
      %p88 = scmp.ne.s32.totalorder %s74, %s75
      %p89 = scmp.eq.s32.totalorder %s23, 1
      %p90 = por %p88, %p89
      %p92 = scmp.ne.s32.totalorder %s75, %s91
      %p93 = scmp.eq.s32.totalorder %s23, 0
      %p94 = por %p92, %p93
      %s95 = ssub.s32 %s24, %s36
      %s96 = ssub.s32 %s25, %s32
      %s97 = sor.u32 %s95, %s96
      %p98 = scmp.eq.s32.totalorder %s97, 0
      %s100 = sadd.s32 %s99, 1
      %s101 = scalar_select %p98, %s99, %s100
      %p104 = pneg %p98
      %p105 = scmp.eq.s32.totalorder %s17, 1
      %p106 = por %p104, %p105
      %p107 = scmp.ne.s32.totalorder %s99, %s102
      %p108 = scmp.eq.s32.totalorder %s17, 0
      %p109 = por %p107, %p108
      %p110 = scmp.ne.s32.totalorder %s99, %s102
      %p111 = scmp.eq.s32.totalorder %s22, 1
      %p112 = por %p110, %p111
      %p113 = scmp.ne.s32.totalorder %s102, %s103
      %p114 = scmp.eq.s32.totalorder %s22, 0
      %p115 = por %p113, %p114
      %p116 = scmp.ne.s32.totalorder %s102, %s103
      %p117 = scmp.eq.s32.totalorder %s23, 1
      %p118 = por %p116, %p117
      %p120 = scmp.ne.s32.totalorder %s103, %s119
      %p121 = scmp.eq.s32.totalorder %s23, 0
      %p122 = por %p120, %p121
      %s123 = ssub.s32 %s24, %s36
      %s124 = ssub.s32 %s25, %s32
      %s125 = sor.u32 %s123, %s124
      %p126 = scmp.eq.s32.totalorder %s125, 0
      %s128 = sadd.s32 %s127, 1
      %s129 = scalar_select %p126, %s127, %s128
      %p132 = pneg %p126
      %p133 = scmp.eq.s32.totalorder %s17, 1
      %p134 = por %p132, %p133
      %p135 = scmp.ne.s32.totalorder %s127, %s130
      %p136 = scmp.eq.s32.totalorder %s17, 0
      %p137 = por %p135, %p136
      %p138 = scmp.ne.s32.totalorder %s127, %s130
      %p139 = scmp.eq.s32.totalorder %s22, 1
      %p140 = por %p138, %p139
      %p141 = scmp.ne.s32.totalorder %s130, %s131
      %p142 = scmp.eq.s32.totalorder %s22, 0
      %p143 = por %p141, %p142
      %p144 = scmp.ne.s32.totalorder %s130, %s131
      %p145 = scmp.eq.s32.totalorder %s23, 1
      %p146 = por %p144, %p145
      %p148 = scmp.ne.s32.totalorder %s131, %s147
      %p149 = scmp.eq.s32.totalorder %s23, 0
      %p150 = por %p148, %p149
      %s151 = ssub.s32 %s24, %s36
      %s152 = ssub.s32 %s25, %s32
      %s153 = sor.u32 %s151, %s152
      %p154 = scmp.eq.s32.totalorder %s153, 0
      %s156 = sadd.s32 %s155, 1
      %s157 = scalar_select %p154, %s155, %s156
      %p160 = pneg %p154
      %p161 = scmp.eq.s32.totalorder %s17, 1
      %p162 = por %p160, %p161
      %p163 = scmp.ne.s32.totalorder %s155, %s158
      %p164 = scmp.eq.s32.totalorder %s17, 0
      %p165 = por %p163, %p164
      %p166 = scmp.ne.s32.totalorder %s155, %s158
      %p167 = scmp.eq.s32.totalorder %s22, 1
      %p168 = por %p166, %p167
      %p169 = scmp.ne.s32.totalorder %s158, %s159
      %p170 = scmp.eq.s32.totalorder %s22, 0
      %p171 = por %p169, %p170
      %p172 = scmp.ne.s32.totalorder %s158, %s159
      %p173 = scmp.eq.s32.totalorder %s23, 1
      %p174 = por %p172, %p173
      %p176 = scmp.ne.s32.totalorder %s159, %s175
      %p177 = scmp.eq.s32.totalorder %s23, 0
      %p178 = por %p176, %p177
      %s179 = ssub.s32 %s24, %s36
      %s180 = ssub.s32 %s25, %s32
      %s181 = sor.u32 %s179, %s180
      %p182 = scmp.eq.s32.totalorder %s181, 0
      %s184 = sadd.s32 %s183, 1
      %s185 = scalar_select %p182, %s183, %s184
      %p188 = pneg %p182
      %p189 = scmp.eq.s32.totalorder %s17, 1
      %p190 = por %p188, %p189
      %p191 = scmp.ne.s32.totalorder %s183, %s186
      %p192 = scmp.eq.s32.totalorder %s17, 0
      %p193 = por %p191, %p192
      %p194 = scmp.ne.s32.totalorder %s183, %s186
      %p195 = scmp.eq.s32.totalorder %s22, 1
      %p196 = por %p194, %p195
      %p197 = scmp.ne.s32.totalorder %s186, %s187
      %p198 = scmp.eq.s32.totalorder %s22, 0
      %p199 = por %p197, %p198
      %p200 = scmp.ne.s32.totalorder %s186, %s187
      %p201 = scmp.eq.s32.totalorder %s23, 1
      %p202 = por %p200, %p201
      %p204 = scmp.ne.s32.totalorder %s187, %s203
      %p205 = scmp.eq.s32.totalorder %s23, 0
      %p206 = por %p204, %p205
      %s207 = ssub.s32 %s24, %s36
      %s208 = ssub.s32 %s25, %s32
      %s209 = sor.u32 %s207, %s208
      %p210 = scmp.eq.s32.totalorder %s209, 0
      %s212 = sadd.s32 %s211, 1
      %s213 = scalar_select %p210, %s211, %s212
      %p216 = pneg %p210
      %p217 = scmp.eq.s32.totalorder %s17, 1
      %p218 = por %p216, %p217
      %p219 = scmp.ne.s32.totalorder %s211, %s214
      %p220 = scmp.eq.s32.totalorder %s17, 0
      %p221 = por %p219, %p220
      %p222 = scmp.ne.s32.totalorder %s211, %s214
      %p223 = scmp.eq.s32.totalorder %s22, 1
      %p224 = por %p222, %p223
      %p225 = scmp.ne.s32.totalorder %s214, %s215
      %p226 = scmp.eq.s32.totalorder %s22, 0
      %p227 = por %p225, %p226
      %p228 = scmp.ne.s32.totalorder %s214, %s215
      %p229 = scmp.eq.s32.totalorder %s23, 1
      %p230 = por %p228, %p229
      %p232 = scmp.ne.s32.totalorder %s215, %s231
      %p233 = scmp.eq.s32.totalorder %s23, 0
      %p234 = por %p232, %p233
      %s235 = ssub.s32 %s24, %s36
      %s236 = ssub.s32 %s25, %s32
      %s237 = sor.u32 %s235, %s236
      %p238 = scmp.eq.s32.totalorder %s237, 0
      %s240 = sadd.s32 %s239, 1
      %s241 = scalar_select %p238, %s239, %s240
      %p244 = pneg %p238
      %p245 = scmp.eq.s32.totalorder %s17, 1
      %p246 = por %p244, %p245
      %p247 = scmp.ne.s32.totalorder %s239, %s242
      %p248 = scmp.eq.s32.totalorder %s17, 0
      %p249 = por %p247, %p248
      %p250 = scmp.ne.s32.totalorder %s239, %s242
      %p251 = scmp.eq.s32.totalorder %s22, 1
      %p252 = por %p250, %p251
      %p253 = scmp.ne.s32.totalorder %s242, %s243
      %p254 = scmp.eq.s32.totalorder %s22, 0
      %p255 = por %p253, %p254
      %p256 = scmp.ne.s32.totalorder %s242, %s243
      %p257 = scmp.eq.s32.totalorder %s23, 1
      %p258 = por %p256, %p257
      %p260 = scmp.ne.s32.totalorder %s243, %s259
      %p261 = scmp.eq.s32.totalorder %s23, 0
      %p262 = por %p260, %p261
      %p263 = scmp.le.s32.totalorder 1, %s17
      %p264 = scmp.lt.s32.totalorder %s17, 3
      %p265 = pnand %p263, %p264
      %p266 = pneg %p265
      // Predicated region
      $region9: #{isotropic_gaussian_forward.1} parent=5 // pred_check
        _
      $region10: #{isotropic_gaussian_forward.1} parent=5 // pred_check_branch
        %268 = sbr.rel (%p265) target = $region12
      $region11: #{isotropic_gaussian_forward.1} parent=5 // pred_region
        %s269 = ssub.s32 %s17, 1
      $region12: #{isotropic_gaussian_forward.1} parent=5 // pred_fallthru
        _
      %p270 = scmp.lt.s32.totalorder %s17, 2
      // Predicated region
      $region13: #{isotropic_gaussian_forward.1} parent=5 // pred_check
        %p271 = pneg %p270
      $region14: #{isotropic_gaussian_forward.1} parent=5 // pred_check_branch
        %273 = sbr.rel (%p271) target = $region16
      $region15: #{isotropic_gaussian_forward.1} parent=5 // pred_region
        // Predicated region
        $region17: #{isotropic_gaussian_forward.1} parent=15 // pred_check
          %p274 = pneg %p51
        $region18: #{isotropic_gaussian_forward.1} parent=15 // pred_check_branch
          %276 = sbr.rel (%p274) target = $region20
        $region19: #{isotropic_gaussian_forward.1} parent=15 // pred_region
          %p277 = scmp.lt.s32.totalorder %s24, 1
          %s278 = scalar_select %p277, %s24, 1
          %p279 = scmp.lt.s32.totalorder %s25, 1
          %s280 = scalar_select %p279, %s25, 1
          %s281 = smul.addr %s278, 2
          %s282 = sadd.s32 %s280, %s281
          %s283 = smul.addr %s282, 8
          %s284 = scalar_lea.vmem %s0, %s283
        $region20: #{isotropic_gaussian_forward.1} parent=15 // pred_fallthru
          _
        // Predicated region
        $region21: #{isotropic_gaussian_forward.1} parent=15 // pred_check
          %p285 = pneg %p81
        $region22: #{isotropic_gaussian_forward.1} parent=15 // pred_check_branch
          %287 = sbr.rel (%p285) target = $region24
        $region23: #{isotropic_gaussian_forward.1} parent=15 // pred_region
          %s288 = sadd.s32 %s25, 1
          %p289 = scmp.lt.s32.totalorder %s24, 1
          %s290 = scalar_select %p289, %s24, 1
          %p291 = scmp.lt.s32.totalorder %s288, 1
          %s292 = scalar_select %p291, %s288, 1
          %s293 = smul.addr %s290, 2
          %s294 = sadd.s32 %s292, %s293
          %s295 = smul.addr %s294, 8
          %s296 = scalar_lea.vmem %s1, %s295
          %s297 = sadd.s32 %s25, 1
        $region24: #{isotropic_gaussian_forward.1} parent=15 // pred_fallthru
          _
        // Predicated region
        $region25: #{isotropic_gaussian_forward.1} parent=15 // pred_check
          %p298 = pneg %p109
        $region26: #{isotropic_gaussian_forward.1} parent=15 // pred_check_branch
          %300 = sbr.rel (%p298) target = $region28
        $region27: #{isotropic_gaussian_forward.1} parent=15 // pred_region
          %p301 = scmp.lt.s32.totalorder %s24, 1
          %s302 = scalar_select %p301, %s24, 1
          %p303 = scmp.lt.s32.totalorder %s25, 0
          %s304 = scalar_select %p303, %s25, 0
          %s305 = sadd.s32 %s304, %s302
          %s306 = smul.addr %s305, 8
          %s307 = scalar_lea.vmem %s2, %s306
        $region28: #{isotropic_gaussian_forward.1} parent=15 // pred_fallthru
          _
        // Predicated region
        $region29: #{isotropic_gaussian_forward.1} parent=15 // pred_check
          %p308 = pneg %p137
        $region30: #{isotropic_gaussian_forward.1} parent=15 // pred_check_branch
          %310 = sbr.rel (%p308) target = $region32
        $region31: #{isotropic_gaussian_forward.1} parent=15 // pred_region
          %p311 = scmp.lt.s32.totalorder %s24, 1
          %s312 = scalar_select %p311, %s24, 1
          %p313 = scmp.lt.s32.totalorder %s25, 0
          %s314 = scalar_select %p313, %s25, 0
          %s315 = sadd.s32 %s314, %s312
          %s316 = smul.addr %s315, 8
          %s317 = scalar_lea.vmem %s3, %s316
        $region32: #{isotropic_gaussian_forward.1} parent=15 // pred_fallthru
          _
        // Predicated region
        $region33: #{isotropic_gaussian_forward.1} parent=15 // pred_check
          %p318 = pneg %p165
        $region34: #{isotropic_gaussian_forward.1} parent=15 // pred_check_branch
          %320 = sbr.rel (%p318) target = $region36
        $region35: #{isotropic_gaussian_forward.1} parent=15 // pred_region
          %p321 = scmp.lt.s32.totalorder %s24, 1
          %s322 = scalar_select %p321, %s24, 1
          %p323 = scmp.lt.s32.totalorder %s25, 0
          %s324 = scalar_select %p323, %s25, 0
          %s325 = sadd.s32 %s324, %s322
          %s326 = smul.addr %s325, 8
          %s327 = scalar_lea.vmem %s4, %s326
        $region36: #{isotropic_gaussian_forward.1} parent=15 // pred_fallthru
          _
      $region16: #{isotropic_gaussian_forward.1} parent=5 // pred_fallthru
        _
      %p328 = scmp.le.s32.totalorder 1, %s17
      %p329 = scmp.lt.s32.totalorder %s17, 3
      %p330 = pnand %p328, %p329
      %p331 = pneg %p330
      // Predicated region
      $region37: #{isotropic_gaussian_forward.1} parent=5 // pred_check
        _
      $region38: #{isotropic_gaussian_forward.1} parent=5 // pred_check_branch
        %333 = sbr.rel (%p330) target = $region40
      $region39: #{isotropic_gaussian_forward.1} parent=5 // pred_region
        %s334 = ssub.s32 %s17, 1
        %p335 = scmp.lt.s32.totalorder %s26, 1
        %s336 = scalar_select %p335, %s26, 1
        %p337 = scmp.lt.s32.totalorder %s27, 1
        %s338 = scalar_select %p337, %s27, 1
        %s339 = smul.addr %s336, 2
        %s340 = sadd.s32 %s338, %s339
        %s341 = smul.addr %s340, 8
        %s342 = scalar_lea.vmem %s0, %s341
        %p343 = pneg %p57
        %p344 = pneg %p54
        %s345 = sadd.s32 %s27, 1
        %p346 = scmp.lt.s32.totalorder %s26, 1
        %s347 = scalar_select %p346, %s26, 1
        %p348 = scmp.lt.s32.totalorder %s345, 1
        %s349 = scalar_select %p348, %s345, 1
        %s350 = smul.addr %s347, 2
        %s351 = sadd.s32 %s349, %s350
        %s352 = smul.addr %s351, 8
        %s353 = scalar_lea.vmem %s1, %s352
        %p354 = pneg %p87
        %p355 = pneg %p84
        %p356 = scmp.lt.s32.totalorder %s26, 1
        %s357 = scalar_select %p356, %s26, 1
        %p358 = scmp.lt.s32.totalorder %s27, 0
        %s359 = scalar_select %p358, %s27, 0
        %s360 = sadd.s32 %s359, %s357
        %s361 = smul.addr %s360, 8
        %s362 = scalar_lea.vmem %s2, %s361
        %p363 = pneg %p115
        %p364 = pneg %p112
        %p365 = scmp.lt.s32.totalorder %s26, 1
        %s366 = scalar_select %p365, %s26, 1
        %p367 = scmp.lt.s32.totalorder %s27, 0
        %s368 = scalar_select %p367, %s27, 0
        %s369 = sadd.s32 %s368, %s366
        %s370 = smul.addr %s369, 8
        %s371 = scalar_lea.vmem %s3, %s370
        %p372 = pneg %p143
        %p373 = pneg %p140
        %p374 = scmp.lt.s32.totalorder %s26, 1
        %s375 = scalar_select %p374, %s26, 1
        %p376 = scmp.lt.s32.totalorder %s27, 0
        %s377 = scalar_select %p376, %s27, 0
        %s378 = sadd.s32 %s377, %s375
        %s379 = smul.addr %s378, 8
        %s380 = scalar_lea.vmem %s4, %s379
        %p381 = pneg %p171
        %p382 = pneg %p168
        %p383 = pneg %p199
        %p384 = pneg %p196
        %p385 = scmp.lt.s32.totalorder %s26, 1
        %s386 = scalar_select %p385, %s26, 1
        %p387 = scmp.lt.s32.totalorder %s27, 0
        %s388 = scalar_select %p387, %s27, 0
        %s389 = sadd.s32 %s388, %s386
        %s390 = smul.addr %s389, 8
        %s391 = scalar_lea.vmem %s5, %s390
        %p392 = pneg %p227
        %p393 = pneg %p224
        %p394 = scmp.lt.s32.totalorder %s26, 1
        %s395 = scalar_select %p394, %s26, 1
        %p396 = scmp.lt.s32.totalorder %s27, 0
        %s397 = scalar_select %p396, %s27, 0
        %s398 = sadd.s32 %s397, %s395
        %s399 = smul.addr %s398, 8
        %s400 = scalar_lea.vmem %s6, %s399
        %p401 = pneg %p255
        %p402 = pneg %p252
        %s403 = sand.u32 %s242, 1
        %s404 = scalar_lea.sflag [#allocation3], %s403
        %s405 = sand.u32 %s242, 1
        %s406 = smul.addr %s405, 8
        %s407 = scalar_lea.vmem [#allocation2], %s406
        %p408 = scmp.lt.s32.totalorder %s26, 1
        %s409 = scalar_select %p408, %s26, 1
        %p410 = scmp.lt.s32.totalorder %s27, 1
        %s411 = scalar_select %p410, %s27, 1
        %s412 = smul.addr %s409, 2
        %s413 = sadd.s32 %s411, %s412
        %s414 = smul.addr %s413, 8
        %s415 = scalar_lea.vmem %s0, %s414
        %s416 = sadd.s32 %s27, 1
        %p417 = scmp.lt.s32.totalorder %s26, 1
        %s418 = scalar_select %p417, %s26, 1
        %p419 = scmp.lt.s32.totalorder %s416, 1
        %s420 = scalar_select %p419, %s416, 1
        %s421 = smul.addr %s418, 2
        %s422 = sadd.s32 %s420, %s421
        %s423 = smul.addr %s422, 8
        %s424 = scalar_lea.vmem %s1, %s423
        %s425 = sadd.s32 %s27, 1
        %p426 = scmp.lt.s32.totalorder %s26, 1
        %s427 = scalar_select %p426, %s26, 1
        %p428 = scmp.lt.s32.totalorder %s27, 0
        %s429 = scalar_select %p428, %s27, 0
        %s430 = sadd.s32 %s429, %s427
        %s431 = smul.addr %s430, 8
        %s432 = scalar_lea.vmem %s2, %s431
        %p433 = scmp.lt.s32.totalorder %s26, 1
        %s434 = scalar_select %p433, %s26, 1
        %p435 = scmp.lt.s32.totalorder %s27, 0
        %s436 = scalar_select %p435, %s27, 0
        %s437 = sadd.s32 %s436, %s434
        %s438 = smul.addr %s437, 8
        %s439 = scalar_lea.vmem %s3, %s438
        %p440 = scmp.lt.s32.totalorder %s26, 1
        %s441 = scalar_select %p440, %s26, 1
        %p442 = scmp.lt.s32.totalorder %s27, 0
        %s443 = scalar_select %p442, %s27, 0
        %s444 = sadd.s32 %s443, %s441
        %s445 = smul.addr %s444, 8
        %s446 = scalar_lea.vmem %s4, %s445
        %p447 = scmp.lt.s32.totalorder %s26, 1
        %s448 = scalar_select %p447, %s26, 1
        %p449 = scmp.lt.s32.totalorder %s27, 0
        %s450 = scalar_select %p449, %s27, 0
        %s451 = sadd.s32 %s450, %s448
        %s452 = smul.addr %s451, 8
        %s453 = scalar_lea.vmem %s5, %s452
        %p454 = scmp.lt.s32.totalorder %s26, 1
        %s455 = scalar_select %p454, %s26, 1
        %p456 = scmp.lt.s32.totalorder %s27, 0
        %s457 = scalar_select %p456, %s27, 0
        %s458 = sadd.s32 %s457, %s455
        %s459 = smul.addr %s458, 8
        %s460 = scalar_lea.vmem %s6, %s459
        %v461 = vld [vmem:[%s424] sm:$0xff]
        %v462 = vmax.f32 %v461, 0.0
        %v463 = vsub.f32 0.0, %v461
        %vm464 = vcmp.ne.f32.partialorder %v463, %v463
        %v465 = vadd.f32 %v461, 0.0
        %v466 = vand.u32 2147483647, %v463
        %v467 = vsub.f32 0.0, %v466
        %v468 = vmul.f32 %v467, 1.442695
        %v469 = vpow.pop %v468
        %v470 = vadd.f32 %v469, 1.0
        %v471 = vlog2.pop %v470
        %v472 = vmul.f32 %v471, 0.6931472
        %v473 = vmul.f32 -0.5, %v469
        %v474 = vadd.f32 %v473, 1.0
        %v475 = vmul.f32 %v474, %v469
        %v476 = vand.u32 2147483647, %v469
        %vm477 = vcmp.lt.f32.partialorder %v476, 0.0004427343
        %v478 = vsel %vm477, %v475, %v472
        %v479 = vadd.f32 %v462, %v478
        %v480 = vsel %vm464, %v465, %v479
        %v481 = vld [vmem:[%s432] sm:$0xff]
        %v482 = vld [vmem:[%s415] sm:$0xff]
        %v483 = vadd.f32 %v481, %v482
        %v484 = vld [vmem:[%s439] sm:$0xff]
        %v485 = vadd.f32 %v484, %v480
        %v486 = vmul.f32 %v485, 1.442695
        %v487 = vpow.pop %v486
        %v488 = vadd.f32 %v487, 1e-09
        %489 = vst [vmem:[%s453] sm:$0xff] %v483
        %v490 = vlog2.pop %v488
        %v491 = vmul.f32 %v490, 0.6931472
        %492 = vst [vmem:[%s460] sm:$0xff] %v491
        %v493 = vld [vmem:[%s446] sm:$0xff]
        %v494 = vmul.f32 %v488, %v493
        %v495 = vadd.f32 %v483, %v494
        %496 = vst [vmem:[%s407] sm:$0xff] %v495
        %p497 = scmp.lt.s32.totalorder %s26, 1
        %s498 = scalar_select %p497, %s26, 1
        %p499 = scmp.lt.s32.totalorder %s27, 0
        %s500 = scalar_select %p499, %s27, 0
        %s501 = sadd.s32 %s500, %s498
        %s502 = smul.addr %s501, 8
        %s503 = scalar_lea.vmem %s5, %s502
        %p504 = scmp.lt.s32.totalorder %s26, 1
        %s505 = scalar_select %p504, %s26, 1
        %p506 = scmp.lt.s32.totalorder %s27, 0
        %s507 = scalar_select %p506, %s27, 0
        %s508 = sadd.s32 %s507, %s505
        %s509 = smul.addr %s508, 8
        %s510 = scalar_lea.vmem %s6, %s509
        %s511 = sand.u32 %s242, 1
        %s512 = scalar_lea.sflag [#allocation3], %s511
        %s513 = sand.u32 %s242, 1
        %s514 = smul.addr %s513, 8
        %s515 = scalar_lea.vmem [#allocation2], %s514
        // Predicated region
        $region41: #{isotropic_gaussian_forward.1} parent=39 // pred_check
          %p516 = pneg %p196
        $region42: #{isotropic_gaussian_forward.1} parent=39 // pred_check_branch
          %518 = sbr.rel (%p516) target = $region44
        $region43: #{isotropic_gaussian_forward.1} parent=39 // pred_region
          _
        $region44: #{isotropic_gaussian_forward.1} parent=39 // pred_fallthru
          _
        // Predicated region
        $region45: #{isotropic_gaussian_forward.1} parent=39 // pred_check
          %p519 = pneg %p224
        $region46: #{isotropic_gaussian_forward.1} parent=39 // pred_check_branch
          %521 = sbr.rel (%p519) target = $region48
        $region47: #{isotropic_gaussian_forward.1} parent=39 // pred_region
          _
        $region48: #{isotropic_gaussian_forward.1} parent=39 // pred_fallthru
          _
        // Predicated region
        $region49: #{isotropic_gaussian_forward.1} parent=39 // pred_check
          %p522 = pneg %p252
        $region50: #{isotropic_gaussian_forward.1} parent=39 // pred_check_branch
          %524 = sbr.rel (%p522) target = $region52
        $region51: #{isotropic_gaussian_forward.1} parent=39 // pred_region
          %s526 = ssub.s32 128, 128
          %527 = vsyncadd %s512, %s526
          %s528 = sadd.s32 %s27, %s26
          %s529 = smul.addr %s528, 128
          %s530 = scalar_lea.hbm %s7, %s529
          %s532 = sshll.u32 %s515, 4
          %s533 = int_to_ptr.vmem [resolvable:$true] %s532
          %535 = dma.vmem_to_hbm [thread:$0]  %s533, 128, %s530, %s512
        $region52: #{isotropic_gaussian_forward.1} parent=39 // pred_fallthru
          _
      $region40: #{isotropic_gaussian_forward.1} parent=5 // pred_fallthru
        _
      %p536 = scmp.le.s32.totalorder 2, %s17
      // Predicated region
      $region53: #{isotropic_gaussian_forward.1} parent=5 // pred_check
        %p537 = pneg %p536
      $region54: #{isotropic_gaussian_forward.1} parent=5 // pred_check_branch
        %539 = sbr.rel (%p537) target = $region56
      $region55: #{isotropic_gaussian_forward.1} parent=5 // pred_region
        %s540 = ssub.s32 %s17, 2
        // Predicated region
        $region57: #{isotropic_gaussian_forward.1} parent=55 // pred_check
          %p541 = pneg %p202
        $region58: #{isotropic_gaussian_forward.1} parent=55 // pred_check_branch
          %543 = sbr.rel (%p541) target = $region60
        $region59: #{isotropic_gaussian_forward.1} parent=55 // pred_region
          %p544 = scmp.lt.s32.totalorder %s28, 1
          %s545 = scalar_select %p544, %s28, 1
          %p546 = scmp.lt.s32.totalorder %s29, 0
          %s547 = scalar_select %p546, %s29, 0
          %s548 = sadd.s32 %s547, %s545
          %s549 = smul.addr %s548, 8
          %s550 = scalar_lea.vmem %s5, %s549
        $region60: #{isotropic_gaussian_forward.1} parent=55 // pred_fallthru
          _
        // Predicated region
        $region61: #{isotropic_gaussian_forward.1} parent=55 // pred_check
          %p551 = pneg %p230
        $region62: #{isotropic_gaussian_forward.1} parent=55 // pred_check_branch
          %553 = sbr.rel (%p551) target = $region64
        $region63: #{isotropic_gaussian_forward.1} parent=55 // pred_region
          %p554 = scmp.lt.s32.totalorder %s28, 1
          %s555 = scalar_select %p554, %s28, 1
          %p556 = scmp.lt.s32.totalorder %s29, 0
          %s557 = scalar_select %p556, %s29, 0
          %s558 = sadd.s32 %s557, %s555
          %s559 = smul.addr %s558, 8
          %s560 = scalar_lea.vmem %s6, %s559
        $region64: #{isotropic_gaussian_forward.1} parent=55 // pred_fallthru
          _
        // Predicated region
        $region65: #{isotropic_gaussian_forward.1} parent=55 // pred_check
          %p561 = pneg %p258
        $region66: #{isotropic_gaussian_forward.1} parent=55 // pred_check_branch
          %563 = sbr.rel (%p561) target = $region68
        $region67: #{isotropic_gaussian_forward.1} parent=55 // pred_region
          %s564 = sand.u32 %s243, 1
          %s565 = scalar_lea.sflag [#allocation3], %s564
          %s566 = sand.u32 %s243, 1
          %s567 = smul.addr %s566, 8
          %s568 = scalar_lea.vmem [#allocation2], %s567
          %569 = dma.done %s565, 128
        $region68: #{isotropic_gaussian_forward.1} parent=55 // pred_fallthru
          _
      $region56: #{isotropic_gaussian_forward.1} parent=5 // pred_fallthru
        _
    $region6: #{isotropic_gaussian_forward.1} parent=1 // loop_footer
      %s21 = sadd.s32 1, %s17
    $region7: #{isotropic_gaussian_forward.1} parent=1 // loop_footer_branch
      %16 = sbr.rel target = $region3
    $region8: #{isotropic_gaussian_forward.1} parent=1 // loop_exit
      _
    %570 = vsyncpa [#allocation3], 1
    %s571 = scalar_lea.sflag [#allocation3], 1
    %572 = vsyncpa %s571, 1

</llo_original>
